<compile_context>
chip_gen: v7x
topology: tpu7x:2x2x1
jax: 0.10.0
libtpu: 0.0.40
codegen_flags: <defaults>
</compile_context>

<pallas_src>
import functools
import math

import numpy as np

import jax
import jax.numpy as jnp
from jax import lax
from jax.experimental import pallas as pl
from jax.experimental.pallas import tpu as pltpu


def _gather_rows_kernel(idx_ref, x_hbm, o_ref, gbuf, sems, *, g, tile_r):
    """One grid step gathers G source rows into one (G, tile_r) output block.

    idx_ref: SMEM int32[K_pad]        (scalar-prefetched row indices)
    x_hbm  : ANY   x.dtype[D, R]      (untiled source, stays in HBM)
    o_ref  : VMEM  x.dtype[G, tile_r] (this step's output block)
    gbuf   : VMEM  x.dtype[G, tile_r] (DMA landing buffer)
    sems   : DMA semaphores, shape (G,)
    """
    kg = pl.program_id(0)
    ri = pl.program_id(1)
    r0 = ri * tile_r
    if tile_r % 128 == 0:
        r0 = pl.multiple_of(r0, 128)

    # Issue all G row-gather DMAs (kept in flight concurrently), then wait.
    copies = []
    for j in range(g):  # g is a small static int -> unrolled
        row = idx_ref[kg * g + j]
        cp = pltpu.make_async_copy(
            x_hbm.at[pl.ds(row, 1), pl.ds(r0, tile_r)],
            gbuf.at[pl.ds(j, 1), :],
            sems.at[j],
        )
        cp.start()
        copies.append(cp)
    for cp in copies:
        cp.wait()

    # One lane-dense vector store of the whole block.
    o_ref[...] = gbuf[...]


def _vmem_budget():
    """Generation-aware VMEM limit + working-set budget (bytes)."""
    cap = 64 * 2**20  # conservative default: v7x physical per-TC VMEM
    try:
        info = pltpu.get_tpu_info()
        cap = int(getattr(info, "vmem_capacity_bytes", cap)) or cap
    except Exception:
        pass
    limit = min((cap * 3) // 4, 96 * 2**20)   # ~96 MiB on v5e/v6e, ~48 MiB on v7x
    limit = max(limit, 32 * 2**20)
    budget = limit // 2                       # tiling working-set target
    return limit, budget


def _pick_tile_r(r, g, itemsize, budget_bytes, max_tile=16384):
    """Largest lane tile that is a multiple of 128, divides r, and keeps the
    (G, tile_r) landing buffer + double-buffered output block within budget."""
    if r % 128 != 0:
        # Single full-width block (block dim equals the array dim is allowed).
        # Working set is only ~3*G rows, so this stays modest even for large R.
        return r
    per_lane_bytes = 3 * max(g, 8) * itemsize     # gbuf (1x) + out block (2x)
    cap = (budget_bytes // per_lane_bytes) // 128 * 128
    cap = max(128, min(max_tile, cap))
    best, t = 128, 128
    while t <= min(r, cap):
        if r % t == 0:
            best = t
        t += 128
    return best


@functools.partial(jax.jit, static_argnames=("dim",))
def _trim_gather_pallas(x, idx, dim):
    """General gather path: DMA-gather of rows idx[k] of x viewed as (D, R)."""
    xm = jnp.moveaxis(x, dim, 0)                  # free when dim == 0
    rest_shape = xm.shape[1:]
    d = xm.shape[0]
    r = math.prod(rest_shape) if rest_shape else 1
    x2 = xm.reshape(d, r)

    k = idx.shape[0]
    # Row-group size G: aim for full 8-sublane output vregs.
    if k <= 8:
        g, k_pad = k, k
    elif k % 8 == 0:
        g, k_pad = 8, k
    else:
        g, k_pad = 8, ((k + 7) // 8) * 8
    if k_pad > k:
        idx = jnp.concatenate([idx, jnp.broadcast_to(idx[-1:], (k_pad - k,))])

    itemsize = x.dtype.itemsize
    vmem_limit, budget = _vmem_budget()
    tile_r = _pick_tile_r(r, g, itemsize, budget)
    k_groups = k_pad // g
    # v7x megacore guard: make sure the parallel grid has >= 2 iterations
    # whenever the lane axis can be split further.
    if k_groups * (r // tile_r) == 1 and tile_r % 256 == 0:
        tile_r //= 2
    r_tiles = r // tile_r

    kernel = functools.partial(_gather_rows_kernel, g=g, tile_r=tile_r)

    out2 = pl.pallas_call(
        kernel,
        out_shape=jax.ShapeDtypeStruct((k_pad, r), x.dtype),
        grid_spec=pltpu.PrefetchScalarGridSpec(
            num_scalar_prefetch=1,                       # indices -> SMEM
            grid=(k_groups, r_tiles),
            in_specs=[pl.BlockSpec(memory_space=pl.ANY)],  # x stays in HBM
            out_specs=pl.BlockSpec((g, tile_r),
                                   lambda kg, ri, idx_ref: (kg, ri)),
            scratch_shapes=[
                pltpu.VMEM((g, tile_r), x.dtype),        # gather landing buffer
                pltpu.SemaphoreType.DMA((g,)),           # one sem per in-flight row
            ],
        ),
        compiler_params=pltpu.CompilerParams(
            dimension_semantics=("parallel", "parallel"),
            vmem_limit_bytes=int(vmem_limit),
        ),
    )(idx, x2)

    if k_pad > k:
        out2 = out2[:k]
    out = out2.reshape((k,) + rest_shape)
    return jnp.moveaxis(out, 0, dim)


def trim_forward(x, indices, dim=-1):
    """Equivalent of TrimModule.forward: torch.index_select(x, dim, indices)."""
    ndim = x.ndim
    dim = dim % ndim
    d = x.shape[dim]
    k = int(indices.shape[0])

    # Degenerate shapes: let XLA handle the empty result.
    if k == 0 or any(s == 0 for s in x.shape):
        empty_idx = jnp.zeros((0,), jnp.int32) if k == 0 else jnp.asarray(indices, jnp.int32)
        return jnp.take(x, empty_idx, axis=dim)

    # `indices` is a fixed module parameter -> try host-side inspection for
    # validation and the contiguous-run fast path.
    try:
        idx_host = np.asarray(jax.device_get(indices)).astype(np.int64).reshape(-1)
    except Exception:
        idx_host = None  # traced indices: no host-side fast paths

    if idx_host is not None:
        if idx_host.min() < 0 or idx_host.max() >= d:
            raise ValueError(
                f"TrimModule: index out of range for dim {dim} of size {d}")
        # Trace-time fast path: a single contiguous run is just a slice
        # (the common 'trim' crop) -- no transpose, no gather, one pass.
        if np.array_equal(idx_host,
                          np.arange(idx_host[0], idx_host[0] + idx_host.size)):
            start = int(idx_host[0])
            return lax.slice_in_dim(x, start, start + k, axis=dim)
        idx_dev = jnp.asarray(idx_host.astype(np.int32))
    else:
        # TODO(synk): torch.index_select raises on OOB indices; with traced
        # indices we clamp instead (TPU DMAs have no in-kernel bounds checks).
        idx_dev = jnp.clip(jnp.asarray(indices, jnp.int32), 0, d - 1)

    return _trim_gather_pallas(x, idx_dev, dim=dim)


if __name__ == "__main__":
    key = jax.random.PRNGKey(0)
    # Input consistent with an NCHW conv feature map: [B, C, H, W]
    B, C, H, W = 2, 4, 16, 16
    x = jax.random.normal(key, (B, C, H, W), dtype=jnp.float32)

    # 1) Non-contiguous trim along the last (W) axis -> Pallas gather kernel.
    idx_w = jnp.array([0, 3, 5, 7, 10, 15], dtype=jnp.int32)
    out_w = jax.block_until_ready(trim_forward(x, idx_w, dim=-1))
    ref_w = jnp.take(x, idx_w, axis=-1)
    assert out_w.shape == ref_w.shape == (B, C, H, idx_w.shape[0])
    assert jnp.array_equal(out_w, ref_w), "mismatch vs reference gather (dim=-1)"

    # 2) Reordered / repeated indices along the channel axis -> Pallas kernel.
    idx_c = jnp.array([3, 1, 0, 2, 1], dtype=jnp.int32)
    out_c = jax.block_until_ready(trim_forward(x, idx_c, dim=1))
    ref_c = jnp.take(x, idx_c, axis=1)
    assert out_c.shape == ref_c.shape
    assert jnp.array_equal(out_c, ref_c), "mismatch vs reference gather (dim=1)"

    # 3) Contiguous run -> trace-time slice fast path.
    idx_s = jnp.arange(4, 12, dtype=jnp.int32)
    out_s = jax.block_until_ready(trim_forward(x, idx_s, dim=-1))
    assert jnp.array_equal(out_s, jnp.take(x, idx_s, axis=-1)), "mismatch (slice fast path)"

    print("KERNEL_OK")
</pallas_src>

<mosaic_0001>
module attributes {stable_mosaic.version = 11 : i64} {
  func.func @_gather_rows_kernel(%arg0: i32, %arg1: i32, %arg2: memref<6xi32, #tpu.memory_space<smem>>, %arg3: memref<16x128xf32, #tpu.memory_space<any>>, %arg4: memref<6x128xf32, #tpu.memory_space<vmem>>, %arg5: memref<6x128xf32, #tpu.memory_space<vmem>>, %arg6: memref<6x!tpu.dma_semaphore, #tpu.memory_space<semaphore_mem>>) attributes {dimension_semantics = [#tpu.dimension_semantics<parallel>, #tpu.dimension_semantics<parallel>], iteration_bounds = array<i64: 1, 1>, scalar_prefetch = 1 : i64, scratch_operands = 2 : i64, tpu.core_type = #tpu.core_type<tc>, window_params = [{}, {transform_indices = @transform_1, window_bounds = array<i64: 6, 128>}]} {
    %c128_i32 = arith.constant 128 : i32
    %0 = arith.muli %arg1, %c128_i32 : i32
    %1 = tpu.assume_multiple %0, 128 : i32
    %c6_i32 = arith.constant 6 : i32
    %2 = arith.muli %arg0, %c6_i32 : i32
    %c0_i32 = arith.constant 0 : i32
    %3 = arith.addi %2, %c0_i32 : i32
    %4 = arith.index_cast %3 : i32 to index
    %5 = memref.load %arg2[%4] : memref<6xi32, #tpu.memory_space<smem>>
    %c0_i32_0 = arith.constant 0 : i32
    %6 = tpu.memref_slice %arg3[%5, %1] : memref<16x128xf32, #tpu.memory_space<any>> -> memref<1x128xf32, #tpu.memory_space<any>>
    %c0_i32_1 = arith.constant 0 : i32
    %c0_i32_2 = arith.constant 0 : i32
    %7 = tpu.memref_slice %arg5[%c0_i32_1, %c0_i32_2] : memref<6x128xf32, #tpu.memory_space<vmem>> -> memref<1x128xf32, #tpu.memory_space<vmem>>
    %8 = tpu.memref_slice %arg6[%c0_i32_0] : memref<6x!tpu.dma_semaphore, #tpu.memory_space<semaphore_mem>> -> memref<1x!tpu.dma_semaphore, #tpu.memory_space<semaphore_mem>>
    %9 = tpu.memref_squeeze %8 : memref<1x!tpu.dma_semaphore, #tpu.memory_space<semaphore_mem>> -> memref<!tpu.dma_semaphore, #tpu.memory_space<semaphore_mem>>
    tpu.enqueue_dma source(%6 : memref<1x128xf32, #tpu.memory_space<any>>) target(%7 : memref<1x128xf32, #tpu.memory_space<vmem>>) target_semaphore(%9 : memref<!tpu.dma_semaphore, #tpu.memory_space<semaphore_mem>>)
    %c6_i32_3 = arith.constant 6 : i32
    %10 = arith.muli %arg0, %c6_i32_3 : i32
    %c1_i32 = arith.constant 1 : i32
    %11 = arith.addi %10, %c1_i32 : i32
    %12 = arith.index_cast %11 : i32 to index
    %13 = memref.load %arg2[%12] : memref<6xi32, #tpu.memory_space<smem>>
    %c1_i32_4 = arith.constant 1 : i32
    %14 = tpu.memref_slice %arg3[%13, %1] : memref<16x128xf32, #tpu.memory_space<any>> -> memref<1x128xf32, #tpu.memory_space<any>>
    %c1_i32_5 = arith.constant 1 : i32
    %c0_i32_6 = arith.constant 0 : i32
    %15 = tpu.memref_slice %arg5[%c1_i32_5, %c0_i32_6] : memref<6x128xf32, #tpu.memory_space<vmem>> -> memref<1x128xf32, #tpu.memory_space<vmem>>
    %16 = tpu.memref_slice %arg6[%c1_i32_4] : memref<6x!tpu.dma_semaphore, #tpu.memory_space<semaphore_mem>> -> memref<1x!tpu.dma_semaphore, #tpu.memory_space<semaphore_mem>>
    %17 = tpu.memref_squeeze %16 : memref<1x!tpu.dma_semaphore, #tpu.memory_space<semaphore_mem>> -> memref<!tpu.dma_semaphore, #tpu.memory_space<semaphore_mem>>
    tpu.enqueue_dma source(%14 : memref<1x128xf32, #tpu.memory_space<any>>) target(%15 : memref<1x128xf32, #tpu.memory_space<vmem>>) target_semaphore(%17 : memref<!tpu.dma_semaphore, #tpu.memory_space<semaphore_mem>>)
    %c6_i32_7 = arith.constant 6 : i32
    %18 = arith.muli %arg0, %c6_i32_7 : i32
    %c2_i32 = arith.constant 2 : i32
    %19 = arith.addi %18, %c2_i32 : i32
    %20 = arith.index_cast %19 : i32 to index
    %21 = memref.load %arg2[%20] : memref<6xi32, #tpu.memory_space<smem>>
    %c2_i32_8 = arith.constant 2 : i32
    %22 = tpu.memref_slice %arg3[%21, %1] : memref<16x128xf32, #tpu.memory_space<any>> -> memref<1x128xf32, #tpu.memory_space<any>>
    %c2_i32_9 = arith.constant 2 : i32
    %c0_i32_10 = arith.constant 0 : i32
    %23 = tpu.memref_slice %arg5[%c2_i32_9, %c0_i32_10] : memref<6x128xf32, #tpu.memory_space<vmem>> -> memref<1x128xf32, #tpu.memory_space<vmem>>
    %24 = tpu.memref_slice %arg6[%c2_i32_8] : memref<6x!tpu.dma_semaphore, #tpu.memory_space<semaphore_mem>> -> memref<1x!tpu.dma_semaphore, #tpu.memory_space<semaphore_mem>>
    %25 = tpu.memref_squeeze %24 : memref<1x!tpu.dma_semaphore, #tpu.memory_space<semaphore_mem>> -> memref<!tpu.dma_semaphore, #tpu.memory_space<semaphore_mem>>
    tpu.enqueue_dma source(%22 : memref<1x128xf32, #tpu.memory_space<any>>) target(%23 : memref<1x128xf32, #tpu.memory_space<vmem>>) target_semaphore(%25 : memref<!tpu.dma_semaphore, #tpu.memory_space<semaphore_mem>>)
    %c6_i32_11 = arith.constant 6 : i32
    %26 = arith.muli %arg0, %c6_i32_11 : i32
    %c3_i32 = arith.constant 3 : i32
    %27 = arith.addi %26, %c3_i32 : i32
    %28 = arith.index_cast %27 : i32 to index
    %29 = memref.load %arg2[%28] : memref<6xi32, #tpu.memory_space<smem>>
    %c3_i32_12 = arith.constant 3 : i32
    %30 = tpu.memref_slice %arg3[%29, %1] : memref<16x128xf32, #tpu.memory_space<any>> -> memref<1x128xf32, #tpu.memory_space<any>>
    %c3_i32_13 = arith.constant 3 : i32
    %c0_i32_14 = arith.constant 0 : i32
    %31 = tpu.memref_slice %arg5[%c3_i32_13, %c0_i32_14] : memref<6x128xf32, #tpu.memory_space<vmem>> -> memref<1x128xf32, #tpu.memory_space<vmem>>
    %32 = tpu.memref_slice %arg6[%c3_i32_12] : memref<6x!tpu.dma_semaphore, #tpu.memory_space<semaphore_mem>> -> memref<1x!tpu.dma_semaphore, #tpu.memory_space<semaphore_mem>>
    %33 = tpu.memref_squeeze %32 : memref<1x!tpu.dma_semaphore, #tpu.memory_space<semaphore_mem>> -> memref<!tpu.dma_semaphore, #tpu.memory_space<semaphore_mem>>
    tpu.enqueue_dma source(%30 : memref<1x128xf32, #tpu.memory_space<any>>) target(%31 : memref<1x128xf32, #tpu.memory_space<vmem>>) target_semaphore(%33 : memref<!tpu.dma_semaphore, #tpu.memory_space<semaphore_mem>>)
    %c6_i32_15 = arith.constant 6 : i32
    %34 = arith.muli %arg0, %c6_i32_15 : i32
    %c4_i32 = arith.constant 4 : i32
    %35 = arith.addi %34, %c4_i32 : i32
    %36 = arith.index_cast %35 : i32 to index
    %37 = memref.load %arg2[%36] : memref<6xi32, #tpu.memory_space<smem>>
    %c4_i32_16 = arith.constant 4 : i32
    %38 = tpu.memref_slice %arg3[%37, %1] : memref<16x128xf32, #tpu.memory_space<any>> -> memref<1x128xf32, #tpu.memory_space<any>>
    %c4_i32_17 = arith.constant 4 : i32
    %c0_i32_18 = arith.constant 0 : i32
    %39 = tpu.memref_slice %arg5[%c4_i32_17, %c0_i32_18] : memref<6x128xf32, #tpu.memory_space<vmem>> -> memref<1x128xf32, #tpu.memory_space<vmem>>
    %40 = tpu.memref_slice %arg6[%c4_i32_16] : memref<6x!tpu.dma_semaphore, #tpu.memory_space<semaphore_mem>> -> memref<1x!tpu.dma_semaphore, #tpu.memory_space<semaphore_mem>>
    %41 = tpu.memref_squeeze %40 : memref<1x!tpu.dma_semaphore, #tpu.memory_space<semaphore_mem>> -> memref<!tpu.dma_semaphore, #tpu.memory_space<semaphore_mem>>
    tpu.enqueue_dma source(%38 : memref<1x128xf32, #tpu.memory_space<any>>) target(%39 : memref<1x128xf32, #tpu.memory_space<vmem>>) target_semaphore(%41 : memref<!tpu.dma_semaphore, #tpu.memory_space<semaphore_mem>>)
    %c6_i32_19 = arith.constant 6 : i32
    %42 = arith.muli %arg0, %c6_i32_19 : i32
    %c5_i32 = arith.constant 5 : i32
    %43 = arith.addi %42, %c5_i32 : i32
    %44 = arith.index_cast %43 : i32 to index
    %45 = memref.load %arg2[%44] : memref<6xi32, #tpu.memory_space<smem>>
    %c5_i32_20 = arith.constant 5 : i32
    %46 = tpu.memref_slice %arg3[%45, %1] : memref<16x128xf32, #tpu.memory_space<any>> -> memref<1x128xf32, #tpu.memory_space<any>>
    %c5_i32_21 = arith.constant 5 : i32
    %c0_i32_22 = arith.constant 0 : i32
    %47 = tpu.memref_slice %arg5[%c5_i32_21, %c0_i32_22] : memref<6x128xf32, #tpu.memory_space<vmem>> -> memref<1x128xf32, #tpu.memory_space<vmem>>
    %48 = tpu.memref_slice %arg6[%c5_i32_20] : memref<6x!tpu.dma_semaphore, #tpu.memory_space<semaphore_mem>> -> memref<1x!tpu.dma_semaphore, #tpu.memory_space<semaphore_mem>>
    %49 = tpu.memref_squeeze %48 : memref<1x!tpu.dma_semaphore, #tpu.memory_space<semaphore_mem>> -> memref<!tpu.dma_semaphore, #tpu.memory_space<semaphore_mem>>
    tpu.enqueue_dma source(%46 : memref<1x128xf32, #tpu.memory_space<any>>) target(%47 : memref<1x128xf32, #tpu.memory_space<vmem>>) target_semaphore(%49 : memref<!tpu.dma_semaphore, #tpu.memory_space<semaphore_mem>>)
    %c0_i32_23 = arith.constant 0 : i32
    %50 = tpu.memref_slice %arg3[%5, %1] : memref<16x128xf32, #tpu.memory_space<any>> -> memref<1x128xf32, #tpu.memory_space<any>>
    %c0_i32_24 = arith.constant 0 : i32
    %c0_i32_25 = arith.constant 0 : i32
    %51 = tpu.memref_slice %arg5[%c0_i32_24, %c0_i32_25] : memref<6x128xf32, #tpu.memory_space<vmem>> -> memref<1x128xf32, #tpu.memory_space<vmem>>
    %52 = tpu.memref_slice %arg6[%c0_i32_23] : memref<6x!tpu.dma_semaphore, #tpu.memory_space<semaphore_mem>> -> memref<1x!tpu.dma_semaphore, #tpu.memory_space<semaphore_mem>>
    %53 = tpu.memref_squeeze %52 : memref<1x!tpu.dma_semaphore, #tpu.memory_space<semaphore_mem>> -> memref<!tpu.dma_semaphore, #tpu.memory_space<semaphore_mem>>
    tpu.wait_dma2 semaphore(%53 : memref<!tpu.dma_semaphore, #tpu.memory_space<semaphore_mem>>) src(%50 : memref<1x128xf32, #tpu.memory_space<any>>) dst(%51 : memref<1x128xf32, #tpu.memory_space<vmem>>)
    %c1_i32_26 = arith.constant 1 : i32
    %54 = tpu.memref_slice %arg3[%13, %1] : memref<16x128xf32, #tpu.memory_space<any>> -> memref<1x128xf32, #tpu.memory_space<any>>
    %c1_i32_27 = arith.constant 1 : i32
    %c0_i32_28 = arith.constant 0 : i32
    %55 = tpu.memref_slice %arg5[%c1_i32_27, %c0_i32_28] : memref<6x128xf32, #tpu.memory_space<vmem>> -> memref<1x128xf32, #tpu.memory_space<vmem>>
    %56 = tpu.memref_slice %arg6[%c1_i32_26] : memref<6x!tpu.dma_semaphore, #tpu.memory_space<semaphore_mem>> -> memref<1x!tpu.dma_semaphore, #tpu.memory_space<semaphore_mem>>
    %57 = tpu.memref_squeeze %56 : memref<1x!tpu.dma_semaphore, #tpu.memory_space<semaphore_mem>> -> memref<!tpu.dma_semaphore, #tpu.memory_space<semaphore_mem>>
    tpu.wait_dma2 semaphore(%57 : memref<!tpu.dma_semaphore, #tpu.memory_space<semaphore_mem>>) src(%54 : memref<1x128xf32, #tpu.memory_space<any>>) dst(%55 : memref<1x128xf32, #tpu.memory_space<vmem>>)
    %c2_i32_29 = arith.constant 2 : i32
    %58 = tpu.memref_slice %arg3[%21, %1] : memref<16x128xf32, #tpu.memory_space<any>> -> memref<1x128xf32, #tpu.memory_space<any>>
    %c2_i32_30 = arith.constant 2 : i32
    %c0_i32_31 = arith.constant 0 : i32
    %59 = tpu.memref_slice %arg5[%c2_i32_30, %c0_i32_31] : memref<6x128xf32, #tpu.memory_space<vmem>> -> memref<1x128xf32, #tpu.memory_space<vmem>>
    %60 = tpu.memref_slice %arg6[%c2_i32_29] : memref<6x!tpu.dma_semaphore, #tpu.memory_space<semaphore_mem>> -> memref<1x!tpu.dma_semaphore, #tpu.memory_space<semaphore_mem>>
    %61 = tpu.memref_squeeze %60 : memref<1x!tpu.dma_semaphore, #tpu.memory_space<semaphore_mem>> -> memref<!tpu.dma_semaphore, #tpu.memory_space<semaphore_mem>>
    tpu.wait_dma2 semaphore(%61 : memref<!tpu.dma_semaphore, #tpu.memory_space<semaphore_mem>>) src(%58 : memref<1x128xf32, #tpu.memory_space<any>>) dst(%59 : memref<1x128xf32, #tpu.memory_space<vmem>>)
    %c3_i32_32 = arith.constant 3 : i32
    %62 = tpu.memref_slice %arg3[%29, %1] : memref<16x128xf32, #tpu.memory_space<any>> -> memref<1x128xf32, #tpu.memory_space<any>>
    %c3_i32_33 = arith.constant 3 : i32
    %c0_i32_34 = arith.constant 0 : i32
    %63 = tpu.memref_slice %arg5[%c3_i32_33, %c0_i32_34] : memref<6x128xf32, #tpu.memory_space<vmem>> -> memref<1x128xf32, #tpu.memory_space<vmem>>
    %64 = tpu.memref_slice %arg6[%c3_i32_32] : memref<6x!tpu.dma_semaphore, #tpu.memory_space<semaphore_mem>> -> memref<1x!tpu.dma_semaphore, #tpu.memory_space<semaphore_mem>>
    %65 = tpu.memref_squeeze %64 : memref<1x!tpu.dma_semaphore, #tpu.memory_space<semaphore_mem>> -> memref<!tpu.dma_semaphore, #tpu.memory_space<semaphore_mem>>
    tpu.wait_dma2 semaphore(%65 : memref<!tpu.dma_semaphore, #tpu.memory_space<semaphore_mem>>) src(%62 : memref<1x128xf32, #tpu.memory_space<any>>) dst(%63 : memref<1x128xf32, #tpu.memory_space<vmem>>)
    %c4_i32_35 = arith.constant 4 : i32
    %66 = tpu.memref_slice %arg3[%37, %1] : memref<16x128xf32, #tpu.memory_space<any>> -> memref<1x128xf32, #tpu.memory_space<any>>
    %c4_i32_36 = arith.constant 4 : i32
    %c0_i32_37 = arith.constant 0 : i32
    %67 = tpu.memref_slice %arg5[%c4_i32_36, %c0_i32_37] : memref<6x128xf32, #tpu.memory_space<vmem>> -> memref<1x128xf32, #tpu.memory_space<vmem>>
    %68 = tpu.memref_slice %arg6[%c4_i32_35] : memref<6x!tpu.dma_semaphore, #tpu.memory_space<semaphore_mem>> -> memref<1x!tpu.dma_semaphore, #tpu.memory_space<semaphore_mem>>
    %69 = tpu.memref_squeeze %68 : memref<1x!tpu.dma_semaphore, #tpu.memory_space<semaphore_mem>> -> memref<!tpu.dma_semaphore, #tpu.memory_space<semaphore_mem>>
    tpu.wait_dma2 semaphore(%69 : memref<!tpu.dma_semaphore, #tpu.memory_space<semaphore_mem>>) src(%66 : memref<1x128xf32, #tpu.memory_space<any>>) dst(%67 : memref<1x128xf32, #tpu.memory_space<vmem>>)
    %c5_i32_38 = arith.constant 5 : i32
    %70 = tpu.memref_slice %arg3[%45, %1] : memref<16x128xf32, #tpu.memory_space<any>> -> memref<1x128xf32, #tpu.memory_space<any>>
    %c5_i32_39 = arith.constant 5 : i32
    %c0_i32_40 = arith.constant 0 : i32
    %71 = tpu.memref_slice %arg5[%c5_i32_39, %c0_i32_40] : memref<6x128xf32, #tpu.memory_space<vmem>> -> memref<1x128xf32, #tpu.memory_space<vmem>>
    %72 = tpu.memref_slice %arg6[%c5_i32_38] : memref<6x!tpu.dma_semaphore, #tpu.memory_space<semaphore_mem>> -> memref<1x!tpu.dma_semaphore, #tpu.memory_space<semaphore_mem>>
    %73 = tpu.memref_squeeze %72 : memref<1x!tpu.dma_semaphore, #tpu.memory_space<semaphore_mem>> -> memref<!tpu.dma_semaphore, #tpu.memory_space<semaphore_mem>>
    tpu.wait_dma2 semaphore(%73 : memref<!tpu.dma_semaphore, #tpu.memory_space<semaphore_mem>>) src(%70 : memref<1x128xf32, #tpu.memory_space<any>>) dst(%71 : memref<1x128xf32, #tpu.memory_space<vmem>>)
    %c0 = arith.constant 0 : index
    %c0_41 = arith.constant 0 : index
    %74 = vector.load %arg5[%c0, %c0_41] : memref<6x128xf32, #tpu.memory_space<vmem>>, vector<6x128xf32>
    %c0_42 = arith.constant 0 : index
    %c0_43 = arith.constant 0 : index
    %75 = vector.load %arg4[%c0_42, %c0_43] : memref<6x128xf32, #tpu.memory_space<vmem>>, vector<6x128xf32>
    tpu.vector_store %arg4[%c0_42, %c0_43], %74 {strides = array<i32>} : memref<6x128xf32, #tpu.memory_space<vmem>>, vector<6x128xf32>,
    return
  }
  func.func @transform_1(%arg0: i32, %arg1: i32, %arg2: memref<6xi32, #tpu.memory_space<smem>>) -> (i32, i32) {
    %c0_i32 = arith.constant 0 : i32
    return %arg0, %arg1 : i32, i32
  }
}

</mosaic_0001>

<llo_original>
// kernel: _trim_gather_pallas.1
$region0: #{_trim_gather_pallas.1}
  #allocation0 [shape = 'u32[]', space=smem, size = 0x4, offset = 0x4, fixed_abs, tag = 'smem constant byte address 0x4 - core index']
  #allocation1 [shape = 'u32[144,128]{1,0:T(1,128)}', space=vmem, size = 0x12000, scoped, tag = 'internal scratch']
  #allocation2 [shape = 'f32[6,128]{1,0:T(8,128)}', space=vmem, size = 0x1000, scoped, tag = 'scratch operand']
  #allocation3 [shape = 's32[6]{0}', space=sflag, size = 0x18, scoped, tag = 'scratch operand']
  #allocation4 [shape = 's32[1]{0}', space=sflag, size = 0x4, scoped, tag = 'scoped memory for _trim_gather_pallas.1']
  #allocation5 [shape = 'u8[512]{0}', space=smem, size = 0x200, scoped, tag = 'prefetched SMEM operand 0']
  #allocation6 [shape = 's32[]', space=sflag, size = 0x4, offset = 0, fixed_abs, tag = 'sflag constant byte address 0x0 - dummy sync flag']
  #allocation7 [shape = 's32[]', space=sflag, size = 0x4, offset = 0, fixed_abs, tag = 'sflag constant byte address 0x0 - dummy sync flag']
  #allocation8 [shape = 's32[]', space=sflag, size = 0x4, offset = 0, fixed_abs, tag = 'sflag constant byte address 0x0 - dummy sync flag']
  #allocation9 [shape = 's32[]', space=sflag, size = 0x4, offset = 0, fixed_abs, tag = 'sflag constant byte address 0x0 - dummy sync flag']
  #allocation10 [shape = 's32[]', space=sflag, size = 0x4, offset = 0, fixed_abs, tag = 'sflag constant byte address 0x0 - dummy sync flag']
  #allocation11 [shape = 's32[]', space=sflag, size = 0x4, offset = 0, fixed_abs, tag = 'sflag constant byte address 0x0 - dummy sync flag']
  %s0 = inlined_call_operand.vmem [shape: s32[6], index: 0, kind: input, shape index: {}]
  %s1 = inlined_call_operand.vmem [shape: f32[16,128], index: 1, kind: input, shape index: {}]
  %s2 = inlined_call_operand.vmem [shape: f32[6,128], index: 2, kind: output, shape index: {}]
  %s3 = sld [smem:[#allocation0]]
  $region190: #{_trim_gather_pallas.1} parent=0
    _
  %s5 = ssub.s32 1, %s3
  %s6 = scalar_select 0, %s5, %s3
  %s7 = sshll.u32 %s0, 4
  %s8 = int_to_ptr.vmem [resolvable:$true] %s7
  %10 = dma.vmem_to_smem %s8, 16, [#allocation5], [#allocation4]
  %11 = dma.done [#allocation4], 16
  %12 = sfence
  %s13 = smul.u32 0, 128
  %s14 = smul.u32 0, 6
  %s15 = sld [smem:[#allocation5 + %s14]]
  %s16 = sshra.s32 %s13, 7
  %s17 = sand.u32 %s13, 127
  %s18 = sadd.s32 %s16, %s15
  %s19 = scalar_lea.vmem %s1, %s18
  %p21 = scmp.lt.u32.totalorder 1, 8
  %p22 = pneg %p21
  // Predicated region
  $region2: #{_trim_gather_pallas.1} parent=0 // pred_check
    _
  $region3: #{_trim_gather_pallas.1} parent=0 // pred_check_branch
    %24 = sbr.rel (%p21) target = $region5
  $region4: #{_trim_gather_pallas.1} parent=0 // pred_region
    %s39 = sand.u32 1, 7
    %p40 = scmp.eq.s32.totalorder %s39, 0
    %p41 = pneg %p40
    // Predicated region
    $region17: #{_trim_gather_pallas.1} parent=4 // pred_check
      _
    $region18: #{_trim_gather_pallas.1} parent=4 // pred_check_branch
      %43 = sbr.rel (%p40) target = $region20
    $region19: #{_trim_gather_pallas.1} parent=4 // pred_region
      %s44 = sand.u32 1, 7
      %s45 = ssub.s32 1, %s44
      %s46 = scalar_lea.vmem %s19, %s45
      %s47 = ssub.s32 1, %s44
      %s48 = scalar_lea.vmem [#allocation2], %s47
      %s49 = sshllo.u32 0, %s44
      loop: start=0, step=1, limit=1
      $region21: #{_trim_gather_pallas.1} parent=19 // loop_pre_header
        _
      $region22: #{_trim_gather_pallas.1} parent=19 // loop_header
        %s51 = sphi 0, %s55
        %p52 = scmp.ge.s32.totalorder %s51, 1
        %s56 = sphi %s46, %s46
        %s57 = sphi %s48, %s48
      $region23: #{_trim_gather_pallas.1} parent=19 // loop_header_branch
        %54 = sbr.rel (%p52) target = $region27
      $region24: #{_trim_gather_pallas.1} parent=19 // loop_body
        %v58 = vld [vmem:[%s56] sm:%s49]
        %59 = vst [vmem:[%s57] sm:%s49] %v58
      $region25: #{_trim_gather_pallas.1} parent=19 // loop_footer
        %s55 = sadd.s32 1, %s51
      $region26: #{_trim_gather_pallas.1} parent=19 // loop_footer_branch
        %50 = sbr.rel target = $region22
      $region27: #{_trim_gather_pallas.1} parent=19 // loop_exit
        _
    $region20: #{_trim_gather_pallas.1} parent=4 // pred_fallthru
      _
  $region5: #{_trim_gather_pallas.1} parent=0 // pred_fallthru
    _
  // Predicated region
  $region6: #{_trim_gather_pallas.1} parent=0 // pred_check
    %p25 = pneg %p21
  $region7: #{_trim_gather_pallas.1} parent=0 // pred_check_branch
    %27 = sbr.rel (%p25) target = $region9
  $region8: #{_trim_gather_pallas.1} parent=0 // pred_region
    %s28 = sshllo.u32 0, 1
    loop: start=0, step=1, limit=1
    $region10: #{_trim_gather_pallas.1} parent=8 // loop_pre_header
      _
    $region11: #{_trim_gather_pallas.1} parent=8 // loop_header
      %s30 = sphi 0, %s34
      %p31 = scmp.ge.s32.totalorder %s30, 1
      %s35 = sphi %s19, %s19
      %s36 = sphi [#allocation2], [#allocation2]
    $region12: #{_trim_gather_pallas.1} parent=8 // loop_header_branch
      %33 = sbr.rel (%p31) target = $region16
    $region13: #{_trim_gather_pallas.1} parent=8 // loop_body
      %v37 = vld [vmem:[%s35] sm:%s28]
      %38 = vst [vmem:[%s36] sm:%s28] %v37
    $region14: #{_trim_gather_pallas.1} parent=8 // loop_footer
      %s34 = sadd.s32 1, %s30
    $region15: #{_trim_gather_pallas.1} parent=8 // loop_footer_branch
      %29 = sbr.rel target = $region11
    $region16: #{_trim_gather_pallas.1} parent=8 // loop_exit
      _
  $region9: #{_trim_gather_pallas.1} parent=0 // pred_fallthru
    _
  // Predicated region
  $region28: #{_trim_gather_pallas.1} parent=0 // pred_check
    _
  $region29: #{_trim_gather_pallas.1} parent=0 // pred_check_branch
    %62 = sbr.rel (0) target = $region31
  $region30: #{_trim_gather_pallas.1} parent=0 // pred_region
    %63 = vsyncadd [#allocation3], 16
  $region31: #{_trim_gather_pallas.1} parent=0 // pred_fallthru
    _
  %s64 = sadd.s32 %s14, 1
  %s65 = sld [smem:[#allocation5 + %s64]]
  %s66 = sadd.s32 %s16, %s65
  %s67 = scalar_lea.vmem %s1, %s66
  %s68 = scalar_lea.vmem [#allocation2], 1
  %s69 = scalar_lea.sflag [#allocation3], 1
  %p71 = scmp.lt.u32.totalorder 1, 8
  %p72 = pneg %p71
  // Predicated region
  $region32: #{_trim_gather_pallas.1} parent=0 // pred_check
    _
  $region33: #{_trim_gather_pallas.1} parent=0 // pred_check_branch
    %74 = sbr.rel (%p71) target = $region35
  $region34: #{_trim_gather_pallas.1} parent=0 // pred_region
    %s89 = sand.u32 1, 7
    %p90 = scmp.eq.s32.totalorder %s89, 0
    %p91 = pneg %p90
    // Predicated region
    $region47: #{_trim_gather_pallas.1} parent=34 // pred_check
      _
    $region48: #{_trim_gather_pallas.1} parent=34 // pred_check_branch
      %93 = sbr.rel (%p90) target = $region50
    $region49: #{_trim_gather_pallas.1} parent=34 // pred_region
      %s94 = sand.u32 1, 7
      %s95 = ssub.s32 1, %s94
      %s96 = scalar_lea.vmem %s67, %s95
      %s97 = ssub.s32 1, %s94
      %s98 = scalar_lea.vmem %s68, %s97 [#allocation2]
      %s99 = sshllo.u32 0, %s94
      loop: start=0, step=1, limit=1
      $region51: #{_trim_gather_pallas.1} parent=49 // loop_pre_header
        _
      $region52: #{_trim_gather_pallas.1} parent=49 // loop_header
        %s101 = sphi 0, %s105
        %p102 = scmp.ge.s32.totalorder %s101, 1
        %s106 = sphi %s96, %s96
        %s107 = sphi %s98, %s98
      $region53: #{_trim_gather_pallas.1} parent=49 // loop_header_branch
        %104 = sbr.rel (%p102) target = $region57
      $region54: #{_trim_gather_pallas.1} parent=49 // loop_body
        %v108 = vld [vmem:[%s106] sm:%s99]
        %109 = vst [vmem:[%s107] sm:%s99] %v108
      $region55: #{_trim_gather_pallas.1} parent=49 // loop_footer
        %s105 = sadd.s32 1, %s101
      $region56: #{_trim_gather_pallas.1} parent=49 // loop_footer_branch
        %100 = sbr.rel target = $region52
      $region57: #{_trim_gather_pallas.1} parent=49 // loop_exit
        _
    $region50: #{_trim_gather_pallas.1} parent=34 // pred_fallthru
      _
  $region35: #{_trim_gather_pallas.1} parent=0 // pred_fallthru
    _
  // Predicated region
  $region36: #{_trim_gather_pallas.1} parent=0 // pred_check
    %p75 = pneg %p71
  $region37: #{_trim_gather_pallas.1} parent=0 // pred_check_branch
    %77 = sbr.rel (%p75) target = $region39
  $region38: #{_trim_gather_pallas.1} parent=0 // pred_region
    %s78 = sshllo.u32 0, 1
    loop: start=0, step=1, limit=1
    $region40: #{_trim_gather_pallas.1} parent=38 // loop_pre_header
      _
    $region41: #{_trim_gather_pallas.1} parent=38 // loop_header
      %s80 = sphi 0, %s84
      %p81 = scmp.ge.s32.totalorder %s80, 1
      %s85 = sphi %s67, %s67
      %s86 = sphi %s68, %s68
    $region42: #{_trim_gather_pallas.1} parent=38 // loop_header_branch
      %83 = sbr.rel (%p81) target = $region46
    $region43: #{_trim_gather_pallas.1} parent=38 // loop_body
      %v87 = vld [vmem:[%s85] sm:%s78]
      %88 = vst [vmem:[%s86] sm:%s78] %v87
    $region44: #{_trim_gather_pallas.1} parent=38 // loop_footer
      %s84 = sadd.s32 1, %s80
    $region45: #{_trim_gather_pallas.1} parent=38 // loop_footer_branch
      %79 = sbr.rel target = $region41
    $region46: #{_trim_gather_pallas.1} parent=38 // loop_exit
      _
  $region39: #{_trim_gather_pallas.1} parent=0 // pred_fallthru
    _
  // Predicated region
  $region58: #{_trim_gather_pallas.1} parent=0 // pred_check
    _
  $region59: #{_trim_gather_pallas.1} parent=0 // pred_check_branch
    %112 = sbr.rel (0) target = $region61
  $region60: #{_trim_gather_pallas.1} parent=0 // pred_region
    %113 = vsyncadd %s69, 16
  $region61: #{_trim_gather_pallas.1} parent=0 // pred_fallthru
    _
  %s114 = sadd.s32 %s14, 2
  %s115 = sld [smem:[#allocation5 + %s114]]
  %s116 = sadd.s32 %s16, %s115
  %s117 = scalar_lea.vmem %s1, %s116
  %s118 = scalar_lea.vmem [#allocation2], 2
  %s119 = scalar_lea.sflag [#allocation3], 2
  %p121 = scmp.lt.u32.totalorder 1, 8
  %p122 = pneg %p121
  // Predicated region
  $region62: #{_trim_gather_pallas.1} parent=0 // pred_check
    _
  $region63: #{_trim_gather_pallas.1} parent=0 // pred_check_branch
    %124 = sbr.rel (%p121) target = $region65
  $region64: #{_trim_gather_pallas.1} parent=0 // pred_region
    %s139 = sand.u32 1, 7
    %p140 = scmp.eq.s32.totalorder %s139, 0
    %p141 = pneg %p140
    // Predicated region
    $region77: #{_trim_gather_pallas.1} parent=64 // pred_check
      _
    $region78: #{_trim_gather_pallas.1} parent=64 // pred_check_branch
      %143 = sbr.rel (%p140) target = $region80
    $region79: #{_trim_gather_pallas.1} parent=64 // pred_region
      %s144 = sand.u32 1, 7
      %s145 = ssub.s32 1, %s144
      %s146 = scalar_lea.vmem %s117, %s145
      %s147 = ssub.s32 1, %s144
      %s148 = scalar_lea.vmem %s118, %s147 [#allocation2]
      %s149 = sshllo.u32 0, %s144
      loop: start=0, step=1, limit=1
      $region81: #{_trim_gather_pallas.1} parent=79 // loop_pre_header
        _
      $region82: #{_trim_gather_pallas.1} parent=79 // loop_header
        %s151 = sphi 0, %s155
        %p152 = scmp.ge.s32.totalorder %s151, 1
        %s156 = sphi %s146, %s146
        %s157 = sphi %s148, %s148
      $region83: #{_trim_gather_pallas.1} parent=79 // loop_header_branch
        %154 = sbr.rel (%p152) target = $region87
      $region84: #{_trim_gather_pallas.1} parent=79 // loop_body
        %v158 = vld [vmem:[%s156] sm:%s149]
        %159 = vst [vmem:[%s157] sm:%s149] %v158
      $region85: #{_trim_gather_pallas.1} parent=79 // loop_footer
        %s155 = sadd.s32 1, %s151
      $region86: #{_trim_gather_pallas.1} parent=79 // loop_footer_branch
        %150 = sbr.rel target = $region82
      $region87: #{_trim_gather_pallas.1} parent=79 // loop_exit
        _
    $region80: #{_trim_gather_pallas.1} parent=64 // pred_fallthru
      _
  $region65: #{_trim_gather_pallas.1} parent=0 // pred_fallthru
    _
  // Predicated region
  $region66: #{_trim_gather_pallas.1} parent=0 // pred_check
    %p125 = pneg %p121
  $region67: #{_trim_gather_pallas.1} parent=0 // pred_check_branch
    %127 = sbr.rel (%p125) target = $region69
  $region68: #{_trim_gather_pallas.1} parent=0 // pred_region
    %s128 = sshllo.u32 0, 1
    loop: start=0, step=1, limit=1
    $region70: #{_trim_gather_pallas.1} parent=68 // loop_pre_header
      _
    $region71: #{_trim_gather_pallas.1} parent=68 // loop_header
      %s130 = sphi 0, %s134
      %p131 = scmp.ge.s32.totalorder %s130, 1
      %s135 = sphi %s117, %s117
      %s136 = sphi %s118, %s118
    $region72: #{_trim_gather_pallas.1} parent=68 // loop_header_branch
      %133 = sbr.rel (%p131) target = $region76
    $region73: #{_trim_gather_pallas.1} parent=68 // loop_body
      %v137 = vld [vmem:[%s135] sm:%s128]
      %138 = vst [vmem:[%s136] sm:%s128] %v137
    $region74: #{_trim_gather_pallas.1} parent=68 // loop_footer
      %s134 = sadd.s32 1, %s130
    $region75: #{_trim_gather_pallas.1} parent=68 // loop_footer_branch
      %129 = sbr.rel target = $region71
    $region76: #{_trim_gather_pallas.1} parent=68 // loop_exit
      _
  $region69: #{_trim_gather_pallas.1} parent=0 // pred_fallthru
    _
  // Predicated region
  $region88: #{_trim_gather_pallas.1} parent=0 // pred_check
    _
  $region89: #{_trim_gather_pallas.1} parent=0 // pred_check_branch
    %162 = sbr.rel (0) target = $region91
  $region90: #{_trim_gather_pallas.1} parent=0 // pred_region
    %163 = vsyncadd %s119, 16
  $region91: #{_trim_gather_pallas.1} parent=0 // pred_fallthru
    _
  %s164 = sadd.s32 %s14, 3
  %s165 = sld [smem:[#allocation5 + %s164]]
  %s166 = sadd.s32 %s16, %s165
  %s167 = scalar_lea.vmem %s1, %s166
  %s168 = scalar_lea.vmem [#allocation2], 3
  %s169 = scalar_lea.sflag [#allocation3], 3
  %p171 = scmp.lt.u32.totalorder 1, 8
  %p172 = pneg %p171
  // Predicated region
  $region92: #{_trim_gather_pallas.1} parent=0 // pred_check
    _
  $region93: #{_trim_gather_pallas.1} parent=0 // pred_check_branch
    %174 = sbr.rel (%p171) target = $region95
  $region94: #{_trim_gather_pallas.1} parent=0 // pred_region
    %s189 = sand.u32 1, 7
    %p190 = scmp.eq.s32.totalorder %s189, 0
    %p191 = pneg %p190
    // Predicated region
    $region107: #{_trim_gather_pallas.1} parent=94 // pred_check
      _
    $region108: #{_trim_gather_pallas.1} parent=94 // pred_check_branch
      %193 = sbr.rel (%p190) target = $region110
    $region109: #{_trim_gather_pallas.1} parent=94 // pred_region
      %s194 = sand.u32 1, 7
      %s195 = ssub.s32 1, %s194
      %s196 = scalar_lea.vmem %s167, %s195
      %s197 = ssub.s32 1, %s194
      %s198 = scalar_lea.vmem %s168, %s197 [#allocation2]
      %s199 = sshllo.u32 0, %s194
      loop: start=0, step=1, limit=1
      $region111: #{_trim_gather_pallas.1} parent=109 // loop_pre_header
        _
      $region112: #{_trim_gather_pallas.1} parent=109 // loop_header
        %s201 = sphi 0, %s205
        %p202 = scmp.ge.s32.totalorder %s201, 1
        %s206 = sphi %s196, %s196
        %s207 = sphi %s198, %s198
      $region113: #{_trim_gather_pallas.1} parent=109 // loop_header_branch
        %204 = sbr.rel (%p202) target = $region117
      $region114: #{_trim_gather_pallas.1} parent=109 // loop_body
        %v208 = vld [vmem:[%s206] sm:%s199]
        %209 = vst [vmem:[%s207] sm:%s199] %v208
      $region115: #{_trim_gather_pallas.1} parent=109 // loop_footer
        %s205 = sadd.s32 1, %s201
      $region116: #{_trim_gather_pallas.1} parent=109 // loop_footer_branch
        %200 = sbr.rel target = $region112
      $region117: #{_trim_gather_pallas.1} parent=109 // loop_exit
        _
    $region110: #{_trim_gather_pallas.1} parent=94 // pred_fallthru
      _
  $region95: #{_trim_gather_pallas.1} parent=0 // pred_fallthru
    _
  // Predicated region
  $region96: #{_trim_gather_pallas.1} parent=0 // pred_check
    %p175 = pneg %p171
  $region97: #{_trim_gather_pallas.1} parent=0 // pred_check_branch
    %177 = sbr.rel (%p175) target = $region99
  $region98: #{_trim_gather_pallas.1} parent=0 // pred_region
    %s178 = sshllo.u32 0, 1
    loop: start=0, step=1, limit=1
    $region100: #{_trim_gather_pallas.1} parent=98 // loop_pre_header
      _
    $region101: #{_trim_gather_pallas.1} parent=98 // loop_header
      %s180 = sphi 0, %s184
      %p181 = scmp.ge.s32.totalorder %s180, 1
      %s185 = sphi %s167, %s167
      %s186 = sphi %s168, %s168
    $region102: #{_trim_gather_pallas.1} parent=98 // loop_header_branch
      %183 = sbr.rel (%p181) target = $region106
    $region103: #{_trim_gather_pallas.1} parent=98 // loop_body
      %v187 = vld [vmem:[%s185] sm:%s178]
      %188 = vst [vmem:[%s186] sm:%s178] %v187
    $region104: #{_trim_gather_pallas.1} parent=98 // loop_footer
      %s184 = sadd.s32 1, %s180
    $region105: #{_trim_gather_pallas.1} parent=98 // loop_footer_branch
      %179 = sbr.rel target = $region101
    $region106: #{_trim_gather_pallas.1} parent=98 // loop_exit
      _
  $region99: #{_trim_gather_pallas.1} parent=0 // pred_fallthru
    _
  // Predicated region
  $region118: #{_trim_gather_pallas.1} parent=0 // pred_check
    _
  $region119: #{_trim_gather_pallas.1} parent=0 // pred_check_branch
    %212 = sbr.rel (0) target = $region121
  $region120: #{_trim_gather_pallas.1} parent=0 // pred_region
    %213 = vsyncadd %s169, 16
  $region121: #{_trim_gather_pallas.1} parent=0 // pred_fallthru
    _
  %s214 = sadd.s32 %s14, 4
  %s215 = sld [smem:[#allocation5 + %s214]]
  %s216 = sadd.s32 %s16, %s215
  %s217 = scalar_lea.vmem %s1, %s216
  %s218 = scalar_lea.vmem [#allocation2], 4
  %s219 = scalar_lea.sflag [#allocation3], 4
  %p221 = scmp.lt.u32.totalorder 1, 8
  %p222 = pneg %p221
  // Predicated region
  $region122: #{_trim_gather_pallas.1} parent=0 // pred_check
    _
  $region123: #{_trim_gather_pallas.1} parent=0 // pred_check_branch
    %224 = sbr.rel (%p221) target = $region125
  $region124: #{_trim_gather_pallas.1} parent=0 // pred_region
    %s239 = sand.u32 1, 7
    %p240 = scmp.eq.s32.totalorder %s239, 0
    %p241 = pneg %p240
    // Predicated region
    $region137: #{_trim_gather_pallas.1} parent=124 // pred_check
      _
    $region138: #{_trim_gather_pallas.1} parent=124 // pred_check_branch
      %243 = sbr.rel (%p240) target = $region140
    $region139: #{_trim_gather_pallas.1} parent=124 // pred_region
      %s244 = sand.u32 1, 7
      %s245 = ssub.s32 1, %s244
      %s246 = scalar_lea.vmem %s217, %s245
      %s247 = ssub.s32 1, %s244
      %s248 = scalar_lea.vmem %s218, %s247 [#allocation2]
      %s249 = sshllo.u32 0, %s244
      loop: start=0, step=1, limit=1
      $region141: #{_trim_gather_pallas.1} parent=139 // loop_pre_header
        _
      $region142: #{_trim_gather_pallas.1} parent=139 // loop_header
        %s251 = sphi 0, %s255
        %p252 = scmp.ge.s32.totalorder %s251, 1
        %s256 = sphi %s246, %s246
        %s257 = sphi %s248, %s248
      $region143: #{_trim_gather_pallas.1} parent=139 // loop_header_branch
        %254 = sbr.rel (%p252) target = $region147
      $region144: #{_trim_gather_pallas.1} parent=139 // loop_body
        %v258 = vld [vmem:[%s256] sm:%s249]
        %259 = vst [vmem:[%s257] sm:%s249] %v258
      $region145: #{_trim_gather_pallas.1} parent=139 // loop_footer
        %s255 = sadd.s32 1, %s251
      $region146: #{_trim_gather_pallas.1} parent=139 // loop_footer_branch
        %250 = sbr.rel target = $region142
      $region147: #{_trim_gather_pallas.1} parent=139 // loop_exit
        _
    $region140: #{_trim_gather_pallas.1} parent=124 // pred_fallthru
      _
  $region125: #{_trim_gather_pallas.1} parent=0 // pred_fallthru
    _
  // Predicated region
  $region126: #{_trim_gather_pallas.1} parent=0 // pred_check
    %p225 = pneg %p221
  $region127: #{_trim_gather_pallas.1} parent=0 // pred_check_branch
    %227 = sbr.rel (%p225) target = $region129
  $region128: #{_trim_gather_pallas.1} parent=0 // pred_region
    %s228 = sshllo.u32 0, 1
    loop: start=0, step=1, limit=1
    $region130: #{_trim_gather_pallas.1} parent=128 // loop_pre_header
      _
    $region131: #{_trim_gather_pallas.1} parent=128 // loop_header
      %s230 = sphi 0, %s234
      %p231 = scmp.ge.s32.totalorder %s230, 1
      %s235 = sphi %s217, %s217
      %s236 = sphi %s218, %s218
    $region132: #{_trim_gather_pallas.1} parent=128 // loop_header_branch
      %233 = sbr.rel (%p231) target = $region136
    $region133: #{_trim_gather_pallas.1} parent=128 // loop_body
      %v237 = vld [vmem:[%s235] sm:%s228]
      %238 = vst [vmem:[%s236] sm:%s228] %v237
    $region134: #{_trim_gather_pallas.1} parent=128 // loop_footer
      %s234 = sadd.s32 1, %s230
    $region135: #{_trim_gather_pallas.1} parent=128 // loop_footer_branch
      %229 = sbr.rel target = $region131
    $region136: #{_trim_gather_pallas.1} parent=128 // loop_exit
      _
  $region129: #{_trim_gather_pallas.1} parent=0 // pred_fallthru
    _
  // Predicated region
  $region148: #{_trim_gather_pallas.1} parent=0 // pred_check
    _
  $region149: #{_trim_gather_pallas.1} parent=0 // pred_check_branch
    %262 = sbr.rel (0) target = $region151
  $region150: #{_trim_gather_pallas.1} parent=0 // pred_region
    %263 = vsyncadd %s219, 16
  $region151: #{_trim_gather_pallas.1} parent=0 // pred_fallthru
    _
  %s264 = sadd.s32 %s14, 5
  %s265 = sld [smem:[#allocation5 + %s264]]
  %s266 = sadd.s32 %s16, %s265
  %s267 = scalar_lea.vmem %s1, %s266
  %s268 = scalar_lea.vmem [#allocation2], 5
  %s269 = scalar_lea.sflag [#allocation3], 5
  %p271 = scmp.lt.u32.totalorder 1, 8
  %p272 = pneg %p271
  // Predicated region
  $region152: #{_trim_gather_pallas.1} parent=0 // pred_check
    _
  $region153: #{_trim_gather_pallas.1} parent=0 // pred_check_branch
    %274 = sbr.rel (%p271) target = $region155
  $region154: #{_trim_gather_pallas.1} parent=0 // pred_region
    %s289 = sand.u32 1, 7
    %p290 = scmp.eq.s32.totalorder %s289, 0
    %p291 = pneg %p290
    // Predicated region
    $region167: #{_trim_gather_pallas.1} parent=154 // pred_check
      _
    $region168: #{_trim_gather_pallas.1} parent=154 // pred_check_branch
      %293 = sbr.rel (%p290) target = $region170
    $region169: #{_trim_gather_pallas.1} parent=154 // pred_region
      %s294 = sand.u32 1, 7
      %s295 = ssub.s32 1, %s294
      %s296 = scalar_lea.vmem %s267, %s295
      %s297 = ssub.s32 1, %s294
      %s298 = scalar_lea.vmem %s268, %s297 [#allocation2]
      %s299 = sshllo.u32 0, %s294
      loop: start=0, step=1, limit=1
      $region171: #{_trim_gather_pallas.1} parent=169 // loop_pre_header
        _
      $region172: #{_trim_gather_pallas.1} parent=169 // loop_header
        %s301 = sphi 0, %s305
        %p302 = scmp.ge.s32.totalorder %s301, 1
        %s306 = sphi %s296, %s296
        %s307 = sphi %s298, %s298
      $region173: #{_trim_gather_pallas.1} parent=169 // loop_header_branch
        %304 = sbr.rel (%p302) target = $region177
      $region174: #{_trim_gather_pallas.1} parent=169 // loop_body
        %v308 = vld [vmem:[%s306] sm:%s299]
        %309 = vst [vmem:[%s307] sm:%s299] %v308
      $region175: #{_trim_gather_pallas.1} parent=169 // loop_footer
        %s305 = sadd.s32 1, %s301
      $region176: #{_trim_gather_pallas.1} parent=169 // loop_footer_branch
        %300 = sbr.rel target = $region172
      $region177: #{_trim_gather_pallas.1} parent=169 // loop_exit
        _
    $region170: #{_trim_gather_pallas.1} parent=154 // pred_fallthru
      _
  $region155: #{_trim_gather_pallas.1} parent=0 // pred_fallthru
    _
  // Predicated region
  $region156: #{_trim_gather_pallas.1} parent=0 // pred_check
    %p275 = pneg %p271
  $region157: #{_trim_gather_pallas.1} parent=0 // pred_check_branch
    %277 = sbr.rel (%p275) target = $region159
  $region158: #{_trim_gather_pallas.1} parent=0 // pred_region
    %s278 = sshllo.u32 0, 1
    loop: start=0, step=1, limit=1
    $region160: #{_trim_gather_pallas.1} parent=158 // loop_pre_header
      _
    $region161: #{_trim_gather_pallas.1} parent=158 // loop_header
      %s280 = sphi 0, %s284
      %p281 = scmp.ge.s32.totalorder %s280, 1
      %s285 = sphi %s267, %s267
      %s286 = sphi %s268, %s268
    $region162: #{_trim_gather_pallas.1} parent=158 // loop_header_branch
      %283 = sbr.rel (%p281) target = $region166
    $region163: #{_trim_gather_pallas.1} parent=158 // loop_body
      %v287 = vld [vmem:[%s285] sm:%s278]
      %288 = vst [vmem:[%s286] sm:%s278] %v287
    $region164: #{_trim_gather_pallas.1} parent=158 // loop_footer
      %s284 = sadd.s32 1, %s280
    $region165: #{_trim_gather_pallas.1} parent=158 // loop_footer_branch
      %279 = sbr.rel target = $region161
    $region166: #{_trim_gather_pallas.1} parent=158 // loop_exit
      _
  $region159: #{_trim_gather_pallas.1} parent=0 // pred_fallthru
    _
  // Predicated region
  $region178: #{_trim_gather_pallas.1} parent=0 // pred_check
    _
  $region179: #{_trim_gather_pallas.1} parent=0 // pred_check_branch
    %312 = sbr.rel (0) target = $region181
  $region180: #{_trim_gather_pallas.1} parent=0 // pred_region
    %313 = vsyncadd %s269, 16
  $region181: #{_trim_gather_pallas.1} parent=0 // pred_fallthru
    _
  %s314 = smul.u32 1, 1
  %s315 = sshll.u32 %s314, 4
  %316 = dma.done [#allocation3], %s315
  %s317 = sshll.u32 %s314, 4
  %318 = dma.done %s69, %s317
  %s319 = sshll.u32 %s314, 4
  %320 = dma.done %s119, %s319
  %s321 = sshll.u32 %s314, 4
  %322 = dma.done %s169, %s321
  %s323 = sshll.u32 %s314, 4
  %324 = dma.done %s219, %s323
  %s325 = sshll.u32 %s314, 4
  %326 = dma.done %s269, %s325
  %v327 = vld [vmem:[#allocation2] sm:$0x3f]
  %328 = vst [vmem:[%s2] sm:$0x3f] %v327
  // Predicated region
  $region182: #{_trim_gather_pallas.1} parent=0 // pred_check
    _
  $region183: #{_trim_gather_pallas.1} parent=0 // pred_check_branch
    %330 = sbr.rel (0) target = $region185
  $region184: #{_trim_gather_pallas.1} parent=0 // pred_region
    _
  $region185: #{_trim_gather_pallas.1} parent=0 // pred_fallthru
    _
  // Predicated region
  $region186: #{_trim_gather_pallas.1} parent=0 // pred_check
    _
  $region187: #{_trim_gather_pallas.1} parent=0 // pred_check_branch
    %332 = sbr.rel (0) target = $region189
  $region188: #{_trim_gather_pallas.1} parent=0 // pred_region
    _
  $region189: #{_trim_gather_pallas.1} parent=0 // pred_fallthru
    _
  %333 = vsyncmov [#allocation3]
  %s334 = vpop.sfrf %333
  %p335 = scmp.eq.s32.totalorder %s334, 0
  %p336 = pneg %p335
  %338 = shalt.err (%p336)
  %s339 = scalar_lea.sflag [#allocation3], 1
  %340 = vsyncmov %s339
  %s341 = vpop.sfrf %340
  %p342 = scmp.eq.s32.totalorder %s341, 0
  %p343 = pneg %p342
  %345 = shalt.err (%p343)
  %s346 = scalar_lea.sflag [#allocation3], 2
  %347 = vsyncmov %s346
  %s348 = vpop.sfrf %347
  %p349 = scmp.eq.s32.totalorder %s348, 0
  %p350 = pneg %p349
  %352 = shalt.err (%p350)
  %s353 = scalar_lea.sflag [#allocation3], 3
  %354 = vsyncmov %s353
  %s355 = vpop.sfrf %354
  %p356 = scmp.eq.s32.totalorder %s355, 0
  %p357 = pneg %p356
  %359 = shalt.err (%p357)
  %s360 = scalar_lea.sflag [#allocation3], 4
  %361 = vsyncmov %s360
  %s362 = vpop.sfrf %361
  %p363 = scmp.eq.s32.totalorder %s362, 0
  %p364 = pneg %p363
  %366 = shalt.err (%p364)
  %s367 = scalar_lea.sflag [#allocation3], 5
  %368 = vsyncmov %s367
  %s369 = vpop.sfrf %368
  %p370 = scmp.eq.s32.totalorder %s369, 0
  %p371 = pneg %p370
  %373 = shalt.err (%p371)

</llo_original>
